<compile_context>
chip_gen: v7x
topology: tpu7x:2x2x1
jax: 0.10.0
libtpu: 0.0.40
codegen_flags: <defaults>
</compile_context>

<pallas_src>
import math
import jax
import jax.numpy as jnp
from jax import lax
from jax.experimental import pallas as pl
from jax.experimental.pallas import tpu as pltpu

KS_CONV = 5   # self.ks_conv
KS_POOL = 3   # self.ks_pool (stride_pool = 1)
KS_EFF = KS_CONV + (KS_POOL - 1) + (KS_CONV - 1)   # effective 11-tap filter


def cnn1d_mlp_kernel(x_ref, g_ref, gb_ref, w2_ref, b2_ref, w3_ref, b3_ref,
                     h3_ref, var_ref):
    """Hot path: three MXU matmuls (bf16 operands, f32 accumulation) + ReLU,
    with the conv/pool/conv/fc1 linear prologue pre-folded into g_ref."""
    x = x_ref[...]                                            # (TB, Tin*D) f32

    h1 = jnp.dot(x.astype(g_ref.dtype), g_ref[...],
                 preferred_element_type=jnp.float32)
    h1 = jnp.maximum(h1 + gb_ref[...], 0.0)                   # fc1 + ReLU

    h2 = jnp.dot(h1.astype(w2_ref.dtype), w2_ref[...],
                 preferred_element_type=jnp.float32)
    h2 = jnp.maximum(h2 + b2_ref[...], 0.0)                   # fc2 + ReLU

    h3 = jnp.dot(h2.astype(w3_ref.dtype), w3_ref[...],
                 preferred_element_type=jnp.float32)
    h3 = h3 + b3_ref[...]                                     # fc3
    h3_ref[...] = h3

    # Var = exp(H_fc3[:, nf:]) ** 2  ==  exp(2 * H_fc3[:, nf:])
    nf = h3.shape[1] - var_ref.shape[1]
    var_ref[...] = jnp.exp(2.0 * h3[:, nf:])


def init_params(key, input_dim, seq_len, num_feature=48):
    """Deterministic parameter init with PyTorch-convention shapes."""
    assert input_dim == num_feature, \
        "the PyTorch forward's .view() only works when input_dim == num_feature"
    sigma_size = num_feature * (num_feature + 1) // 2
    l_out_conv1 = math.floor(seq_len - KS_CONV + 1)
    l_out_pool = math.floor((l_out_conv1 - KS_POOL) / 1 + 1)
    l_out_conv2 = math.floor(l_out_pool - KS_CONV + 1)

    ks = jax.random.split(key, 10)

    def u(k, shape, scale):
        return jax.random.uniform(k, shape, jnp.float32, -scale, scale)

    params = dict(
        conv1_w=u(ks[0], (input_dim, 1, KS_CONV), 0.3),        # (O, I/groups, K)
        conv1_b=u(ks[1], (input_dim,), 0.3),
        conv2_w=u(ks[2], (input_dim, 1, KS_CONV), 0.3),
        conv2_b=u(ks[3], (input_dim,), 0.3),
        fc1_w=u(ks[4], (sigma_size * 4, num_feature * l_out_conv2), 0.1),
        fc1_b=u(ks[5], (sigma_size * 4,), 0.1),
        fc2_w=u(ks[6], (sigma_size * 2, sigma_size * 4), 0.1),
        fc2_b=u(ks[7], (sigma_size * 2,), 0.1),
        fc3_w=u(ks[8], (num_feature + sigma_size, sigma_size * 2), 0.1),
        fc3_b=u(ks[9], (num_feature + sigma_size,), 0.1),
    )
    dims = dict(num_feature=num_feature, sigma_size=sigma_size,
                l_out_conv2=l_out_conv2)
    return params, dims


def _fold_linear_prologue(params, dims):
    """conv1 -> avgpool -> conv2 -> fc1 (pre-ReLU) is linear in the raw input
    window, so fold it into one dense matrix G (Tin*D, 4*sigma) + bias.
    This is pure weight preprocessing (hoistable / jit-constant-foldable)."""
    nf = dims["num_feature"]
    L3 = dims["l_out_conv2"]
    out1 = params["fc1_w"].shape[0]
    Tin = L3 + KS_EFF - 1

    w1 = params["conv1_w"][:, 0, :].astype(jnp.float32)        # (D, 5)
    w2 = params["conv2_w"][:, 0, :].astype(jnp.float32)        # (D, 5)
    pool_k = jnp.full((KS_POOL,), 1.0 / KS_POOL, jnp.float32)

    # Effective 11-tap depthwise filter: w_eff[c] = w1[c] * pool * w2[c]
    # (composition of correlations == correlation with the convolved kernels).
    tmp = jax.vmap(lambda a: jnp.convolve(a, pool_k, mode="full"))(w1)       # (D, 7)
    w_eff = jax.vmap(lambda a, b: jnp.convolve(a, b, mode="full"))(tmp, w2)  # (D, 11)
    b_eff = params["conv1_b"] * jnp.sum(w2, axis=1) + params["conv2_b"]      # (D,)

    # PyTorch flatten of H_conv2.view(-1, nf*L3) is channel-major: c*L3 + t.
    # Reorder fc1_w to (t, c, out1).
    fw1_tco = params["fc1_w"].T.reshape(nf, L3, out1).transpose(1, 0, 2)

    # G[s, c, o] = sum_{t + m = s} w_eff[c, m] * fw1_tco[t, c, o]
    G = jnp.zeros((Tin, nf, out1), jnp.float32)
    for m in range(KS_EFF):
        G = G.at[m:m + L3].add(w_eff[:, m][None, :, None] * fw1_tco)
    gb = params["fc1_b"] + jnp.einsum("tco,c->o", fw1_tco, b_eff)

    return G.reshape(Tin * nf, out1), gb, Tin


def cnn1d_forward(params, dims, X, X_last_obsv=None, Mask=None, Delta=None,
                  pad_mask=None, return_hidden=False):
    """Mirrors CNN1D.forward.  X_last_obsv / Mask / Delta / pad_mask are
    accepted (as in PyTorch) but unused by the forward computation."""
    B, S, D = X.shape
    nf = dims["num_feature"]
    sig = dims["sigma_size"]

    G2d, gb, Tin = _fold_linear_prologue(params, dims)
    assert S - 1 == Tin, "forward expects seq_size == seq_len + 1"

    out1 = G2d.shape[1]
    out2 = params["fc2_w"].shape[0]
    out3 = params["fc3_w"].shape[0]
    K1 = Tin * D

    # X.permute(0,2,1)[:, :, :-1] flattened so that index = s*D + c, matching
    # how G was built above.
    x_flat = X[:, :S - 1, :].astype(jnp.float32).reshape(B, K1)

    # bf16 weights (half the HBM->VMEM DMA bytes + bf16 MXU path); f32 biases.
    g_bf16 = G2d.astype(jnp.bfloat16)
    w2_bf16 = params["fc2_w"].T.astype(jnp.bfloat16)            # (out1, out2)
    w3_bf16 = params["fc3_w"].T.astype(jnp.bfloat16)            # (out2, out3)
    gb_2d = gb[None, :].astype(jnp.float32)
    b2_2d = params["fc2_b"][None, :].astype(jnp.float32)
    b3_2d = params["fc3_b"][None, :].astype(jnp.float32)

    # Batch tiling: blocks of up to 256 rows, grid axis marked "parallel".
    TB = B if B <= 256 else 256
    nb = pl.cdiv(B, TB)

    # VMEM budget (double-buffered blocks) + cost hint for the XLA scheduler.
    blk_bytes = (TB * K1 * 4 + TB * out3 * 4 + TB * sig * 4
                 + K1 * out1 * 2 + out1 * out2 * 2 + out2 * out3 * 2
                 + (out1 + out2 + out3) * 4)
    vmem_limit = int(min(max(2 * blk_bytes + (4 << 20), 16 << 20), 64 << 20))
    flops = 2 * B * (K1 * out1 + out1 * out2 + out2 * out3)
    bytes_accessed = (B * K1 * 4 + K1 * out1 * 2 + out1 * out2 * 2
                      + out2 * out3 * 2 + (out1 + out2 + out3) * 4
                      + B * (out3 + sig) * 4)

    def const_idx(b):
        return (0, 0)

    h3, var = pl.pallas_call(
        cnn1d_mlp_kernel,
        grid=(nb,),
        in_specs=[
            pl.BlockSpec((TB, K1), lambda b: (b, 0)),       # x (per batch block)
            pl.BlockSpec((K1, out1), const_idx),            # G       (bf16)
            pl.BlockSpec((1, out1), const_idx),             # gb
            pl.BlockSpec((out1, out2), const_idx),          # fc2 W   (bf16)
            pl.BlockSpec((1, out2), const_idx),             # fc2 b
            pl.BlockSpec((out2, out3), const_idx),          # fc3 W   (bf16)
            pl.BlockSpec((1, out3), const_idx),             # fc3 b
        ],
        out_specs=(
            pl.BlockSpec((TB, out3), lambda b: (b, 0)),     # H_fc3
            pl.BlockSpec((TB, sig), lambda b: (b, 0)),      # Var
        ),
        out_shape=(jax.ShapeDtypeStruct((B, out3), jnp.float32),
                   jax.ShapeDtypeStruct((B, sig), jnp.float32)),
        compiler_params=pltpu.CompilerParams(
            dimension_semantics=("parallel",),
            vmem_limit_bytes=vmem_limit),
        cost_estimate=pl.CostEstimate(
            flops=int(flops), transcendentals=int(B * sig),
            bytes_accessed=int(bytes_accessed)),
    )(x_flat, g_bf16, gb_2d, w2_bf16, b2_2d, w3_bf16, b3_2d)

    mus = h3[:, :nf]
    # sigma[:, tril_i, tril_j] = Var  (scatter is index glue, done in JAX).
    rows, cols = jnp.tril_indices(nf)      # same row-major order as torch.tril_indices
    sigma = jnp.zeros((B, nf, nf), jnp.float32).at[:, rows, cols].set(var)

    if return_hidden:
        return [mus, sigma], h3
    return [mus, sigma]

    # TODO(synk): nn.Dropout(p=dropout_prob) is created in __init__ but never
    # applied in forward(), so it is intentionally omitted here.


def cnn1d_reference(params, dims, X):
    """Pure-JAX f32 reference matching the PyTorch forward, for validation."""
    B, S, D = X.shape
    nf = dims["num_feature"]
    L3 = dims["l_out_conv2"]
    x_in = jnp.transpose(X, (0, 2, 1))[:, :, :-1]                # (B, D, S-1) NCW
    c1 = lax.conv_general_dilated(
        x_in, params["conv1_w"], window_strides=(1,), padding="VALID",
        dimension_numbers=("NCH", "OIH", "NCH"), feature_group_count=nf)
    c1 = c1 + params["conv1_b"][None, :, None]
    L2 = c1.shape[-1] - KS_POOL + 1
    p = (c1[:, :, 0:L2] + c1[:, :, 1:L2 + 1] + c1[:, :, 2:L2 + 2]) / 3.0
    c2 = lax.conv_general_dilated(
        p, params["conv2_w"], window_strides=(1,), padding="VALID",
        dimension_numbers=("NCH", "OIH", "NCH"), feature_group_count=D)
    c2 = c2 + params["conv2_b"][None, :, None]
    flat = c2.reshape(B, nf * L3)                                # channel-major
    h1 = jax.nn.relu(flat @ params["fc1_w"].T + params["fc1_b"])
    h2 = jax.nn.relu(h1 @ params["fc2_w"].T + params["fc2_b"])
    h3 = h2 @ params["fc3_w"].T + params["fc3_b"]
    mus = h3[:, :nf]
    var = jnp.exp(h3[:, nf:]) ** 2
    rows, cols = jnp.tril_indices(nf)
    sigma = jnp.zeros((B, nf, nf), jnp.float32).at[:, rows, cols].set(var)
    return mus, sigma, h3


if __name__ == "__main__":
    # Small shapes consistent with the module (input_dim must equal num_feature).
    input_dim = 8
    num_feature = 8
    seq_len = 16            # __init__ seq_len; forward gets seq_size = seq_len + 1
    batch = 2

    key = jax.random.PRNGKey(0)
    kp, kx = jax.random.split(key)
    params, dims = init_params(kp, input_dim, seq_len, num_feature)

    X = jax.random.normal(kx, (batch, seq_len + 1, input_dim), jnp.float32)
    X_last_obsv = jnp.zeros_like(X)
    Mask = jnp.zeros_like(X)
    Delta = jnp.zeros_like(X)

    mus, sigma = cnn1d_forward(params, dims, X, X_last_obsv, Mask, Delta)
    jax.block_until_ready((mus, sigma))

    mus_ref, sigma_ref, _ = cnn1d_reference(params, dims, X)
    assert mus.shape == (batch, num_feature)
    assert sigma.shape == (batch, num_feature, num_feature)
    # bf16 MXU operands vs. f32 reference -> relaxed tolerance.
    assert jnp.allclose(mus, mus_ref, rtol=2e-2, atol=2e-2)
    assert jnp.allclose(sigma, sigma_ref, rtol=2e-2, atol=2e-2)

    print("KERNEL_OK")
</pallas_src>

<mosaic_0001>
module attributes {stable_mosaic.version = 11 : i64} {
  func.func @cnn1d_mlp_kernel(%arg0: i32, %arg1: memref<2x128xf32, #tpu.memory_space<vmem>>, %arg2: memref<128x144xbf16, #tpu.memory_space<vmem>>, %arg3: memref<1x144xf32, #tpu.memory_space<vmem>>, %arg4: memref<144x72xbf16, #tpu.memory_space<vmem>>, %arg5: memref<1x72xf32, #tpu.memory_space<vmem>>, %arg6: memref<72x44xbf16, #tpu.memory_space<vmem>>, %arg7: memref<1x44xf32, #tpu.memory_space<vmem>>, %arg8: memref<2x44xf32, #tpu.memory_space<vmem>>, %arg9: memref<2x36xf32, #tpu.memory_space<vmem>>) attributes {dimension_semantics = [#tpu.dimension_semantics<parallel>], iteration_bounds = array<i64: 1>, scalar_prefetch = 0 : i64, scratch_operands = 0 : i64, tpu.core_type = #tpu.core_type<tc>, window_params = [{transform_indices = @transform_0, window_bounds = array<i64: 2, 128>}, {pipeline_mode = #tpu.pipeline_mode<synchronous>, transform_indices = @transform_1, window_bounds = array<i64: 128, 144>}, {pipeline_mode = #tpu.pipeline_mode<synchronous>, transform_indices = @transform_2, window_bounds = array<i64: 1, 144>}, {pipeline_mode = #tpu.pipeline_mode<synchronous>, transform_indices = @transform_3, window_bounds = array<i64: 144, 72>}, {pipeline_mode = #tpu.pipeline_mode<synchronous>, transform_indices = @transform_4, window_bounds = array<i64: 1, 72>}, {pipeline_mode = #tpu.pipeline_mode<synchronous>, transform_indices = @transform_5, window_bounds = array<i64: 72, 44>}, {pipeline_mode = #tpu.pipeline_mode<synchronous>, transform_indices = @transform_6, window_bounds = array<i64: 1, 44>}, {transform_indices = @transform_7, window_bounds = array<i64: 2, 44>}, {transform_indices = @transform_8, window_bounds = array<i64: 2, 36>}]} {
    %c0 = arith.constant 0 : index
    %c0_0 = arith.constant 0 : index
    %0 = vector.load %arg1[%c0, %c0_0] : memref<2x128xf32, #tpu.memory_space<vmem>>, vector<2x128xf32>
    %1 = arith.truncf %0 : vector<2x128xf32> to vector<2x128xbf16>
    %c0_1 = arith.constant 0 : index
    %c0_2 = arith.constant 0 : index
    %2 = vector.load %arg2[%c0_1, %c0_2] : memref<128x144xbf16, #tpu.memory_space<vmem>>, vector<128x144xbf16>
    %cst = arith.constant dense<0.000000e+00> : vector<2x144xf32>
    %3 = tpu.matmul %1, %2, %cst {dimension_numbers = #tpu.dot_dimension_numbers<[1], [0], [0], [1], [0, 0, 1, 1], [], []>} : vector<2x128xbf16>, vector<128x144xbf16>, vector<2x144xf32> -> vector<2x144xf32>
    %c0_3 = arith.constant 0 : index
    %c0_4 = arith.constant 0 : index
    %4 = vector.load %arg3[%c0_3, %c0_4] : memref<1x144xf32, #tpu.memory_space<vmem>>, vector<1x144xf32>
    %5 = vector.broadcast %4 : vector<1x144xf32> to vector<2x144xf32>
    %6 = arith.addf %3, %5 : vector<2x144xf32>
    %cst_5 = arith.constant 0.000000e+00 : f32
    %7 = vector.broadcast %cst_5 : f32 to vector<2x144xf32>
    %8 = arith.maximumf %6, %7 : vector<2x144xf32>
    %9 = arith.truncf %8 : vector<2x144xf32> to vector<2x144xbf16>
    %c0_6 = arith.constant 0 : index
    %c0_7 = arith.constant 0 : index
    %10 = vector.load %arg4[%c0_6, %c0_7] : memref<144x72xbf16, #tpu.memory_space<vmem>>, vector<144x72xbf16>
    %cst_8 = arith.constant dense<0.000000e+00> : vector<2x72xf32>
    %11 = tpu.matmul %9, %10, %cst_8 {dimension_numbers = #tpu.dot_dimension_numbers<[1], [0], [0], [1], [0, 0, 1, 1], [], []>} : vector<2x144xbf16>, vector<144x72xbf16>, vector<2x72xf32> -> vector<2x72xf32>
    %c0_9 = arith.constant 0 : index
    %c0_10 = arith.constant 0 : index
    %12 = vector.load %arg5[%c0_9, %c0_10] : memref<1x72xf32, #tpu.memory_space<vmem>>, vector<1x72xf32>
    %13 = vector.broadcast %12 : vector<1x72xf32> to vector<2x72xf32>
    %14 = arith.addf %11, %13 : vector<2x72xf32>
    %cst_11 = arith.constant 0.000000e+00 : f32
    %15 = vector.broadcast %cst_11 : f32 to vector<2x72xf32>
    %16 = arith.maximumf %14, %15 : vector<2x72xf32>
    %17 = arith.truncf %16 : vector<2x72xf32> to vector<2x72xbf16>
    %c0_12 = arith.constant 0 : index
    %c0_13 = arith.constant 0 : index
    %18 = vector.load %arg6[%c0_12, %c0_13] : memref<72x44xbf16, #tpu.memory_space<vmem>>, vector<72x44xbf16>
    %cst_14 = arith.constant dense<0.000000e+00> : vector<2x44xf32>
    %19 = tpu.matmul %17, %18, %cst_14 {dimension_numbers = #tpu.dot_dimension_numbers<[1], [0], [0], [1], [0, 0, 1, 1], [], []>} : vector<2x72xbf16>, vector<72x44xbf16>, vector<2x44xf32> -> vector<2x44xf32>
    %c0_15 = arith.constant 0 : index
    %c0_16 = arith.constant 0 : index
    %20 = vector.load %arg7[%c0_15, %c0_16] : memref<1x44xf32, #tpu.memory_space<vmem>>, vector<1x44xf32>
    %21 = vector.broadcast %20 : vector<1x44xf32> to vector<2x44xf32>
    %22 = arith.addf %19, %21 : vector<2x44xf32>
    %c0_17 = arith.constant 0 : index
    %c0_18 = arith.constant 0 : index
    %23 = vector.load %arg8[%c0_17, %c0_18] : memref<2x44xf32, #tpu.memory_space<vmem>>, vector<2x44xf32>
    tpu.vector_store %arg8[%c0_17, %c0_18], %22 {strides = array<i32>} : memref<2x44xf32, #tpu.memory_space<vmem>>, vector<2x44xf32>,
    %24 = vector.extract_strided_slice %22 {offsets = [0, 8], sizes = [2, 36], strides = [1, 1]} : vector<2x44xf32> to vector<2x36xf32>
    %cst_19 = arith.constant 2.000000e+00 : f32
    %25 = vector.broadcast %cst_19 : f32 to vector<2x36xf32>
    %26 = arith.mulf %25, %24 : vector<2x36xf32>
    %27 = math.exp %26 : vector<2x36xf32>
    %c0_20 = arith.constant 0 : index
    %c0_21 = arith.constant 0 : index
    %28 = vector.load %arg9[%c0_20, %c0_21] : memref<2x36xf32, #tpu.memory_space<vmem>>, vector<2x36xf32>
    tpu.vector_store %arg9[%c0_20, %c0_21], %27 {strides = array<i32>} : memref<2x36xf32, #tpu.memory_space<vmem>>, vector<2x36xf32>,
    return
  }
  func.func @transform_0(%arg0: i32) -> (i32, i32) {
    %c0_i32 = arith.constant 0 : i32
    %c0_i32_0 = arith.constant 0 : i32
    return %arg0, %c0_i32 : i32, i32
  }
  func.func @transform_1(%arg0: i32) -> (i32, i32) {
    %c0_i32 = arith.constant 0 : i32
    %c0_i32_0 = arith.constant 0 : i32
    %c0_i32_1 = arith.constant 0 : i32
    return %c0_i32, %c0_i32_0 : i32, i32
  }
  func.func @transform_2(%arg0: i32) -> (i32, i32) {
    %c0_i32 = arith.constant 0 : i32
    %c0_i32_0 = arith.constant 0 : i32
    %c0_i32_1 = arith.constant 0 : i32
    return %c0_i32, %c0_i32_0 : i32, i32
  }
  func.func @transform_3(%arg0: i32) -> (i32, i32) {
    %c0_i32 = arith.constant 0 : i32
    %c0_i32_0 = arith.constant 0 : i32
    %c0_i32_1 = arith.constant 0 : i32
    return %c0_i32, %c0_i32_0 : i32, i32
  }
  func.func @transform_4(%arg0: i32) -> (i32, i32) {
    %c0_i32 = arith.constant 0 : i32
    %c0_i32_0 = arith.constant 0 : i32
    %c0_i32_1 = arith.constant 0 : i32
    return %c0_i32, %c0_i32_0 : i32, i32
  }
  func.func @transform_5(%arg0: i32) -> (i32, i32) {
    %c0_i32 = arith.constant 0 : i32
    %c0_i32_0 = arith.constant 0 : i32
    %c0_i32_1 = arith.constant 0 : i32
    return %c0_i32, %c0_i32_0 : i32, i32
  }
  func.func @transform_6(%arg0: i32) -> (i32, i32) {
    %c0_i32 = arith.constant 0 : i32
    %c0_i32_0 = arith.constant 0 : i32
    %c0_i32_1 = arith.constant 0 : i32
    return %c0_i32, %c0_i32_0 : i32, i32
  }
  func.func @transform_7(%arg0: i32) -> (i32, i32) {
    %c0_i32 = arith.constant 0 : i32
    %c0_i32_0 = arith.constant 0 : i32
    return %arg0, %c0_i32 : i32, i32
  }
  func.func @transform_8(%arg0: i32) -> (i32, i32) {
    %c0_i32 = arith.constant 0 : i32
    %c0_i32_0 = arith.constant 0 : i32
    return %arg0, %c0_i32 : i32, i32
  }
}

</mosaic_0001>

<llo_original>
// kernel: tpu_custom_call.1
$region0: #{tpu_custom_call.1}
  #allocation0 [shape = 'u32[]', space=smem, size = 0x4, offset = 0x4, fixed_abs, tag = 'smem constant byte address 0x4 - core index']
  #allocation1 [shape = 'u32[144,128]{1,0:T(1,128)}', space=vmem, size = 0x12000, scoped, tag = 'internal scratch']
  %s0 = inlined_call_operand.vmem [shape: f32[2,128], index: 0, kind: input, shape index: {}]
  %s1 = inlined_call_operand.vmem [shape: bf16[128,144], index: 1, kind: input, shape index: {}]
  %s2 = inlined_call_operand.vmem [shape: f32[1,144], index: 2, kind: input, shape index: {}]
  %s3 = inlined_call_operand.vmem [shape: bf16[144,72], index: 3, kind: input, shape index: {}]
  %s4 = inlined_call_operand.vmem [shape: f32[1,72], index: 4, kind: input, shape index: {}]
  %s5 = inlined_call_operand.vmem [shape: bf16[72,44], index: 5, kind: input, shape index: {}]
  %s6 = inlined_call_operand.vmem [shape: f32[1,44], index: 6, kind: input, shape index: {}]
  %s7 = inlined_call_operand.hbm [shape: f32[2,44], index: 7, kind: output, shape index: {0}]
  %s8 = inlined_call_operand.hbm [shape: f32[2,36], index: 8, kind: output, shape index: {1}]
  %9 = xla_tuple %s7, %s8
  %s10 = sld [smem:[#allocation0]]
  $region46: #{tpu_custom_call.1} parent=0
    _
  %s12 = ssub.s32 1, %s10
  %s13 = scalar_select 0, %s12, %s10
  $region1: #{tpu_custom_call.1} parent=0
    #allocation2 [shape = 'u8[1024]{0}', space=vmem, size = 0x400, scoped, tag = 'output window, operand 0, single buffered']
    #allocation3 [shape = 's32[1]{0}', space=sflag, size = 0x4, scoped, tag = 'scoped memory for tpu_custom_call.1']
    #allocation4 [shape = 'u8[1024]{0}', space=vmem, size = 0x400, scoped, tag = 'output window, operand 1, single buffered']
    #allocation5 [shape = 's32[1]{0}', space=sflag, size = 0x4, scoped, tag = 'scoped memory for tpu_custom_call.1']
    %14 = vsyncpa [#allocation3], 0
    %15 = vsyncpa [#allocation5], 0
    // Predicated region
    $region2: #{tpu_custom_call.1} parent=1 // pred_check
      _
    $region3: #{tpu_custom_call.1} parent=1 // pred_check_branch
      %17 = sbr.rel (0) target = $region5
    $region4: #{tpu_custom_call.1} parent=1 // pred_region
      _
    $region5: #{tpu_custom_call.1} parent=1 // pred_fallthru
      _
    // Predicated region
    $region6: #{tpu_custom_call.1} parent=1 // pred_check
      _
    $region7: #{tpu_custom_call.1} parent=1 // pred_check_branch
      %19 = sbr.rel (0) target = $region9
    $region8: #{tpu_custom_call.1} parent=1 // pred_region
      _
    $region9: #{tpu_custom_call.1} parent=1 // pred_fallthru
      _
    // Predicated region
    $region10: #{tpu_custom_call.1} parent=1 // pred_check
      _
    $region11: #{tpu_custom_call.1} parent=1 // pred_check_branch
      %21 = sbr.rel (0) target = $region13
    $region12: #{tpu_custom_call.1} parent=1 // pred_region
      _
    $region13: #{tpu_custom_call.1} parent=1 // pred_fallthru
      _
    // Predicated region
    $region14: #{tpu_custom_call.1} parent=1 // pred_check
      _
    $region15: #{tpu_custom_call.1} parent=1 // pred_check_branch
      %23 = sbr.rel (0) target = $region17
    $region16: #{tpu_custom_call.1} parent=1 // pred_region
      _
    $region17: #{tpu_custom_call.1} parent=1 // pred_fallthru
      _
    // Predicated region
    $region18: #{tpu_custom_call.1} parent=1 // pred_check
      _
    $region19: #{tpu_custom_call.1} parent=1 // pred_check_branch
      %25 = sbr.rel (0) target = $region21
    $region20: #{tpu_custom_call.1} parent=1 // pred_region
      _
    $region21: #{tpu_custom_call.1} parent=1 // pred_fallthru
      _
    // Predicated region
    $region22: #{tpu_custom_call.1} parent=1 // pred_check
      _
    $region23: #{tpu_custom_call.1} parent=1 // pred_check_branch
      %27 = sbr.rel (0) target = $region25
    $region24: #{tpu_custom_call.1} parent=1 // pred_region
      _
    $region25: #{tpu_custom_call.1} parent=1 // pred_fallthru
      _
    // Predicated region
    $region26: #{tpu_custom_call.1} parent=1 // pred_check
      _
    $region27: #{tpu_custom_call.1} parent=1 // pred_check_branch
      %29 = sbr.rel (0) target = $region29
    $region28: #{tpu_custom_call.1} parent=1 // pred_region
      _
    $region29: #{tpu_custom_call.1} parent=1 // pred_fallthru
      _
    %v31 = vld [vmem:[%s0] sm:$0x3]
    %v32 = vpack.c.bf16 %v31, %v31
    %v33 = vld [vmem:[%s1] sm:$0xff]
    %v34 = vld [vmem:[%s1 + $0x8] sm:$0xff]
    %v35 = vld [vmem:[%s1 + $0x10] sm:$0xff]
    %v36 = vld [vmem:[%s1 + $0x18] sm:$0xff]
    %v37 = vld [vmem:[%s1 + $0x20] sm:$0xff]
    %v38 = vld [vmem:[%s1 + $0x28] sm:$0xff]
    %v39 = vld [vmem:[%s1 + $0x30] sm:$0xff]
    %v40 = vld [vmem:[%s1 + $0x38] sm:$0xff]
    %v41 = vld [vmem:[%s1 + $0x40] sm:$0xff]
    %v42 = vld [vmem:[%s1 + $0x48] sm:$0xff]
    %v43 = vld [vmem:[%s1 + $0x50] sm:$0xff]
    %v44 = vld [vmem:[%s1 + $0x58] sm:$0xff]
    %v45 = vld [vmem:[%s1 + $0x60] sm:$0xff]
    %v46 = vld [vmem:[%s1 + $0x68] sm:$0xff]
    %v47 = vld [vmem:[%s1 + $0x70] sm:$0xff]
    %v48 = vld [vmem:[%s1 + $0x78] sm:$0xff]
    %v49 = vld [vmem:[%s2] sm:$0x3]
    %v51 = vlaneseq
    %v52 = vshrl.u32 %v51, 7
    %v53 = vsub.s32 0, %v52
    %v54 = vrot.slane %v49, %v53
    %v55 = vlaneseq
    %v56 = vshrl.u32 %v55, 7
    %v57 = vsub.s32 1, %v56
    %v58 = vrot.slane %v49, %v57
    %v77 = vunpack.c.l.b16 %v33
    %v78 = vunpack.c.h.b16 %v33
    %v79 = vunpack.c.l.b16 %v34
    %v80 = vunpack.c.h.b16 %v34
    %v81 = vunpack.c.l.b16 %v35
    %v82 = vunpack.c.h.b16 %v35
    %v83 = vunpack.c.l.b16 %v36
    %v84 = vunpack.c.h.b16 %v36
    %v85 = vunpack.c.l.b16 %v37
    %v86 = vunpack.c.h.b16 %v37
    %v87 = vunpack.c.l.b16 %v38
    %v88 = vunpack.c.h.b16 %v38
    %v89 = vunpack.c.l.b16 %v39
    %v90 = vunpack.c.h.b16 %v39
    %v91 = vunpack.c.l.b16 %v40
    %v92 = vunpack.c.h.b16 %v40
    %v93 = vunpack.c.l.b16 %v41
    %v94 = vunpack.c.h.b16 %v41
    %v95 = vunpack.c.l.b16 %v42
    %v96 = vunpack.c.h.b16 %v42
    %v97 = vunpack.c.l.b16 %v43
    %v98 = vunpack.c.h.b16 %v43
    %v99 = vunpack.c.l.b16 %v44
    %v100 = vunpack.c.h.b16 %v44
    %v101 = vunpack.c.l.b16 %v45
    %v102 = vunpack.c.h.b16 %v45
    %v103 = vunpack.c.l.b16 %v46
    %v104 = vunpack.c.h.b16 %v46
    %v105 = vunpack.c.l.b16 %v47
    %v106 = vunpack.c.h.b16 %v47
    %v107 = vunpack.c.l.b16 %v48
    %v108 = vunpack.c.h.b16 %v48
    %v109 = vpack.c.b16 %v79, %v77
    %v110 = vpack.c.b16 %v80, %v78
    %v111 = vpack.c.b16 %v83, %v81
    %v112 = vpack.c.b16 %v84, %v82
    %v113 = vpack.c.b16 %v87, %v85
    %v114 = vpack.c.b16 %v88, %v86
    %v115 = vpack.c.b16 %v91, %v89
    %v116 = vpack.c.b16 %v92, %v90
    %v117 = vpack.c.b16 %v95, %v93
    %v118 = vpack.c.b16 %v96, %v94
    %v119 = vpack.c.b16 %v99, %v97
    %v120 = vpack.c.b16 %v100, %v98
    %v121 = vpack.c.b16 %v103, %v101
    %v122 = vpack.c.b16 %v104, %v102
    %v123 = vpack.c.b16 %v107, %v105
    %v124 = vpack.c.b16 %v108, %v106
    %141 = vmatprep.subr.bf16.mxu0 %v110
    %142 = vmatpush1.bf16.msra.mxu0 %v109
    %143 = vmatprep.subr.bf16.mxu0 %v112
    %144 = vmatpush1.bf16.msra.mxu0 %v111
    %145 = vmatprep.subr.bf16.mxu0 %v114
    %146 = vmatpush1.bf16.msra.mxu0 %v113
    %147 = vmatprep.subr.bf16.mxu0 %v116
    %148 = vmatpush1.bf16.msra.mxu0 %v115
    %149 = vmatprep.subr.bf16.mxu0 %v118
    %150 = vmatpush1.bf16.msra.mxu0 %v117
    %151 = vmatprep.subr.bf16.mxu0 %v120
    %152 = vmatpush1.bf16.msra.mxu0 %v119
    %153 = vmatprep.subr.bf16.mxu0 %v122
    %154 = vmatpush1.bf16.msra.mxu0 %v121
    %155 = vmatprep.subr.bf16.mxu0 %v124
    %156 = vmatpush1.bf16.msra.mxu0 %v123
    %157 = vmatprep.subr.bf16.mxu0 0
    %158 = vmatpush1.bf16.msra.mxu0 0
    %159 = vmatprep.subr.bf16.mxu0 0
    %160 = vmatpush1.bf16.msra.mxu0 0
    %161 = vmatprep.subr.bf16.mxu0 0
    %162 = vmatpush1.bf16.msra.mxu0 0
    %163 = vmatprep.subr.bf16.mxu0 0
    %164 = vmatpush1.bf16.msra.mxu0 0
    %165 = vmatprep.subr.bf16.mxu0 0
    %166 = vmatpush1.bf16.msra.mxu0 0
    %167 = vmatprep.subr.bf16.mxu0 0
    %168 = vmatpush1.bf16.msra.mxu0 0
    %169 = vmatprep.subr.bf16.mxu0 0
    %170 = vmatpush1.bf16.msra.mxu0 0
    %171 = vmatprep.subr.bf16.mxu0 0
    %172 = vmatpush1.bf16.msra.mxu0 0
    %173 = vmatprep.mubr.bf16.mxu0 0
    %174 = vmatmul.mubr.bf16.gmra.mrb[0].mxu0 %v32
    %v175 = vpop.f32.mrb[0].mxu0
    %v176 = vadd.f32 %v54, %v175
    %v177 = vpop.f32.mrb[0].mxu0
    %v178 = vadd.f32 %v58, %v177
    %v179 = vpop.f32.mrb[0].mxu0
    %v180 = vpop.f32.mrb[0].mxu0
    %181 = vdwg.mxu0
    %v182 = vmax.f32 %v176, 0.0
    %v183 = vmax.f32 %v178, 0.0
    %v184 = vpack.c.bf16 %v182, %v182
    %v185 = vpack.c.bf16 %v183, %v183
    %v186 = vld [vmem:[%s3] sm:$0xf]
    %v187 = vld [vmem:[%s3 + $0x4] sm:$0xf]
    %v188 = vld [vmem:[%s3 + $0x8] sm:$0xf]
    %v189 = vld [vmem:[%s3 + $0xc] sm:$0xf]
    %v190 = vld [vmem:[%s3 + $0x10] sm:$0xf]
    %v191 = vld [vmem:[%s3 + $0x14] sm:$0xf]
    %v192 = vld [vmem:[%s3 + $0x18] sm:$0xf]
    %v193 = vld [vmem:[%s3 + $0x1c] sm:$0xf]
    %v194 = vld [vmem:[%s3 + $0x20] sm:$0xf]
    %v195 = vld [vmem:[%s3 + $0x24] sm:$0xf]
    %v196 = vld [vmem:[%s3 + $0x28] sm:$0xf]
    %v197 = vld [vmem:[%s3 + $0x2c] sm:$0xf]
    %v198 = vld [vmem:[%s3 + $0x30] sm:$0xf]
    %v199 = vld [vmem:[%s3 + $0x34] sm:$0xf]
    %v200 = vld [vmem:[%s3 + $0x38] sm:$0xf]
    %v201 = vld [vmem:[%s3 + $0x3c] sm:$0xf]
    %v202 = vld [vmem:[%s3 + $0x40] sm:$0xf]
    %v203 = vld [vmem:[%s3 + $0x44] sm:$0xf]
    %v204 = vld [vmem:[%s4] sm:$0x1]
    %v206 = vlaneseq
    %v207 = vshrl.u32 %v206, 7
    %v208 = vsub.s32 0, %v207
    %v209 = vrot.slane %v204, %v208
    %v229 = vunpack.c.l.b16 %v186
    %v230 = vunpack.c.l.b16 %v187
    %v231 = vunpack.c.l.b16 %v188
    %v232 = vunpack.c.l.b16 %v189
    %v233 = vunpack.c.l.b16 %v190
    %v234 = vunpack.c.l.b16 %v191
    %v235 = vunpack.c.l.b16 %v192
    %v236 = vunpack.c.l.b16 %v193
    %v237 = vunpack.c.l.b16 %v194
    %v238 = vunpack.c.l.b16 %v195
    %v239 = vunpack.c.l.b16 %v196
    %v240 = vunpack.c.l.b16 %v197
    %v241 = vunpack.c.l.b16 %v198
    %v242 = vunpack.c.l.b16 %v199
    %v243 = vunpack.c.l.b16 %v200
    %v244 = vunpack.c.l.b16 %v201
    %v245 = vunpack.c.l.b16 %v202
    %v246 = vunpack.c.l.b16 %v203
    %v247 = vpack.c.b16 %v230, %v229
    %v248 = vpack.c.b16 %v232, %v231
    %v249 = vpack.c.b16 %v234, %v233
    %v250 = vpack.c.b16 %v236, %v235
    %v251 = vpack.c.b16 %v238, %v237
    %v252 = vpack.c.b16 %v240, %v239
    %v253 = vpack.c.b16 %v242, %v241
    %v254 = vpack.c.b16 %v244, %v243
    %v255 = vpack.c.b16 %v246, %v245
    %vm265 = vcmask 130048
    %v267 = vsel %vm265, %v185, 0
    %269 = vmatprep.subr.bf16.mxu0 0
    %270 = vmatpush1.bf16.msra.mxu0 %v247
    %271 = vmatprep.subr.bf16.mxu0 0
    %272 = vmatpush1.bf16.msra.mxu0 %v248
    %273 = vmatprep.subr.bf16.mxu0 0
    %274 = vmatpush1.bf16.msra.mxu0 %v249
    %275 = vmatprep.subr.bf16.mxu0 0
    %276 = vmatpush1.bf16.msra.mxu0 %v250
    %277 = vmatprep.subr.bf16.mxu0 0
    %278 = vmatpush1.bf16.msra.mxu0 %v251
    %279 = vmatprep.subr.bf16.mxu0 0
    %280 = vmatpush1.bf16.msra.mxu0 %v252
    %281 = vmatprep.subr.bf16.mxu0 0
    %282 = vmatpush1.bf16.msra.mxu0 %v253
    %283 = vmatprep.subr.bf16.mxu0 0
    %284 = vmatpush1.bf16.msra.mxu0 %v254
    %285 = vmatprep.subr.bf16.mxu0 0
    %286 = vmatpush1.bf16.msra.mxu0 %v255
    %287 = vmatprep.subr.bf16.mxu0 0
    %288 = vmatpush1.bf16.msra.mxu0 0
    %289 = vmatprep.subr.bf16.mxu0 0
    %290 = vmatpush1.bf16.msra.mxu0 0
    %291 = vmatprep.subr.bf16.mxu0 0
    %292 = vmatpush1.bf16.msra.mxu0 0
    %293 = vmatprep.subr.bf16.mxu0 0
    %294 = vmatpush1.bf16.msra.mxu0 0
    %295 = vmatprep.subr.bf16.mxu0 0
    %296 = vmatpush1.bf16.msra.mxu0 0
    %297 = vmatprep.subr.bf16.mxu0 0
    %298 = vmatpush1.bf16.msra.mxu0 0
    %299 = vmatprep.subr.bf16.mxu0 0
    %300 = vmatpush1.bf16.msra.mxu0 0
    %301 = vmatprep.mubr.bf16.mxu0 %v267
    %302 = vmatmul.mubr.bf16.gmra.mrb[0].mxu0 %v184
    %v303 = vpop.f32.mrb[0].mxu0
    %v304 = vadd.f32 %v209, %v303
    %v305 = vpop.f32.mrb[0].mxu0
    %v306 = vpop.f32.mrb[0].mxu0
    %v307 = vpop.f32.mrb[0].mxu0
    %308 = vdwg.mxu0
    %v309 = vmax.f32 %v304, 0.0
    %v310 = vpack.c.bf16 %v309, %v309
    %v311 = vld [vmem:[%s5] sm:$0xf]
    %v312 = vld [vmem:[%s5 + $0x4] sm:$0xf]
    %v313 = vld [vmem:[%s5 + $0x8] sm:$0xf]
    %v314 = vld [vmem:[%s5 + $0xc] sm:$0xf]
    %v315 = vld [vmem:[%s5 + $0x10] sm:$0xf]
    %v316 = vld [vmem:[%s5 + $0x14] sm:$0xf]
    %v317 = vld [vmem:[%s5 + $0x18] sm:$0xf]
    %v318 = vld [vmem:[%s5 + $0x1c] sm:$0xf]
    %v319 = vld [vmem:[%s5 + $0x20] sm:$0xf]
    %v320 = vld [vmem:[%s6] sm:$0x1]
    %v322 = vlaneseq
    %v323 = vshrl.u32 %v322, 7
    %v324 = vsub.s32 0, %v323
    %v325 = vrot.slane %v320, %v324
    %v336 = vunpack.c.l.b16 %v311
    %v337 = vunpack.c.l.b16 %v312
    %v338 = vunpack.c.l.b16 %v313
    %v339 = vunpack.c.l.b16 %v314
    %v340 = vunpack.c.l.b16 %v315
    %v341 = vunpack.c.l.b16 %v316
    %v342 = vunpack.c.l.b16 %v317
    %v343 = vunpack.c.l.b16 %v318
    %v344 = vunpack.c.l.b16 %v319
    %v345 = vpack.c.b16 %v337, %v336
    %v346 = vpack.c.b16 %v339, %v338
    %v347 = vpack.c.b16 %v341, %v340
    %v348 = vpack.c.b16 %v343, %v342
    %v349 = vpack.c.b16 %v344, %v344
    %vm354 = vcmask 588800
    %v356 = vsel %vm354, %v310, 0
    %vm358 = vcmask 1043456
    %v360 = vsel %vm358, %v349, 0
    %362 = vmatprep.subr.bf16.mxu0 0
    %363 = vmatpush1.bf16.msra.mxu0 %v345
    %364 = vmatprep.subr.bf16.mxu0 0
    %365 = vmatpush1.bf16.msra.mxu0 %v346
    %366 = vmatprep.subr.bf16.mxu0 0
    %367 = vmatpush1.bf16.msra.mxu0 %v347
    %368 = vmatprep.subr.bf16.mxu0 0
    %369 = vmatpush1.bf16.msra.mxu0 %v348
    %370 = vmatprep.subr.bf16.mxu0 0
    %371 = vmatpush1.bf16.msra.mxu0 %v360
    %372 = vmatprep.subr.bf16.mxu0 0
    %373 = vmatpush1.bf16.msra.mxu0 0
    %374 = vmatprep.subr.bf16.mxu0 0
    %375 = vmatpush1.bf16.msra.mxu0 0
    %376 = vmatprep.subr.bf16.mxu0 0
    %377 = vmatpush1.bf16.msra.mxu0 0
    %378 = vmatprep.subr.bf16.mxu0 0
    %379 = vmatpush1.bf16.msra.mxu0 0
    %380 = vmatprep.subr.bf16.mxu0 0
    %381 = vmatpush1.bf16.msra.mxu0 0
    %382 = vmatprep.subr.bf16.mxu0 0
    %383 = vmatpush1.bf16.msra.mxu0 0
    %384 = vmatprep.subr.bf16.mxu0 0
    %385 = vmatpush1.bf16.msra.mxu0 0
    %386 = vmatprep.subr.bf16.mxu0 0
    %387 = vmatpush1.bf16.msra.mxu0 0
    %388 = vmatprep.subr.bf16.mxu0 0
    %389 = vmatpush1.bf16.msra.mxu0 0
    %390 = vmatprep.subr.bf16.mxu0 0
    %391 = vmatpush1.bf16.msra.mxu0 0
    %392 = vmatprep.subr.bf16.mxu0 0
    %393 = vmatpush1.bf16.msra.mxu0 0
    %394 = vmatprep.mubr.bf16.mxu0 0
    %395 = vmatmul.mubr.bf16.gmra.mrb[0].mxu0 %v356
    %v396 = vpop.f32.mrb[0].mxu0
    %v397 = vadd.f32 %v325, %v396
    %v398 = vpop.f32.mrb[0].mxu0
    %v399 = vpop.f32.mrb[0].mxu0
    %v400 = vpop.f32.mrb[0].mxu0
    %401 = vdwg.mxu0
    %vm402 = vcmask 353280
    %403 = vst.msk [vmem:[#allocation2] sm:$0x3] %vm402, %v397
    %v404 = vmul.f32 %v397, 2.0
    %v405 = vmul.f32 %v404, 1.442695
    %v406 = vpow.pop %v405
    %408 = vrot.lane.b32.xlu0 %v406, 120
    %v409 = vpop.permute.xlu0 %408
    %vm411 = vcmask 287744
    %412 = vst.msk [vmem:[#allocation4] sm:$0x3] %vm411, %v409
    // Predicated region
    $region30: #{tpu_custom_call.1} parent=1 // pred_check
      _
    $region31: #{tpu_custom_call.1} parent=1 // pred_check_branch
      %414 = sbr.rel (0) target = $region33
    $region32: #{tpu_custom_call.1} parent=1 // pred_region
      %s416 = ssub.s32 32, 32
      %417 = vsyncadd [#allocation3], %s416
      %s419 = sshll.u32 [#allocation2], 4
      %s420 = int_to_ptr.vmem [resolvable:$true] %s419
      %422 = dma.vmem_to_hbm [thread:$0]  %s420, 32, %s7, [#allocation3]
    $region33: #{tpu_custom_call.1} parent=1 // pred_fallthru
      _
    // Predicated region
    $region34: #{tpu_custom_call.1} parent=1 // pred_check
      _
    $region35: #{tpu_custom_call.1} parent=1 // pred_check_branch
      %424 = sbr.rel (0) target = $region37
    $region36: #{tpu_custom_call.1} parent=1 // pred_region
      %s426 = ssub.s32 32, 32
      %427 = vsyncadd [#allocation5], %s426
      %s429 = sshll.u32 [#allocation4], 4
      %s430 = int_to_ptr.vmem [resolvable:$true] %s429
      %432 = dma.vmem_to_hbm [thread:$0]  %s430, 32, %s8, [#allocation5]
    $region37: #{tpu_custom_call.1} parent=1 // pred_fallthru
      _
    // Predicated region
    $region38: #{tpu_custom_call.1} parent=1 // pred_check
      _
    $region39: #{tpu_custom_call.1} parent=1 // pred_check_branch
      %434 = sbr.rel (0) target = $region41
    $region40: #{tpu_custom_call.1} parent=1 // pred_region
      %435 = dma.done [#allocation3], 32
    $region41: #{tpu_custom_call.1} parent=1 // pred_fallthru
      _
    // Predicated region
    $region42: #{tpu_custom_call.1} parent=1 // pred_check
      _
    $region43: #{tpu_custom_call.1} parent=1 // pred_check_branch
      %437 = sbr.rel (0) target = $region45
    $region44: #{tpu_custom_call.1} parent=1 // pred_region
      %438 = dma.done [#allocation5], 32
    $region45: #{tpu_custom_call.1} parent=1 // pred_fallthru
      _
    %439 = vsyncpa [#allocation3], 1
    %440 = vsyncpa [#allocation5], 1

</llo_original>
